<compile_context>
chip_gen: v7x
topology: tpu7x:2x2x1
jax: 0.10.0
libtpu: 0.0.40
codegen_flags: <defaults>
</compile_context>

<pallas_src>
import jax
import jax.numpy as jnp
from jax.experimental import pallas as pl
from jax.experimental.pallas import tpu as pltpu

INPUT_DIM = 48
HIDDEN_DIM = 128
OUTPUT_DIM = 128
BN_EPS = 1e-5


def _mlp_kernel(x_ref, w1_ref, w2_ref, w3_ref, bias_ref, o_ref):
    x = x_ref[...]                                   # (TB, 48) f32 (ragged tail rows are garbage; rows are independent)

    b1 = bias_ref[0:1, :]                            # (1, 128) f32, static slices of the resident bias block
    b2 = bias_ref[1:2, :]
    b3 = bias_ref[2:3, :]

    # --- Linear1 (BN1 pre-folded into w1/b1) + LeakyReLU(0.1) ---
    h = jnp.dot(x.astype(w1_ref.dtype), w1_ref[...],
                preferred_element_type=jnp.float32) + b1
    h = jnp.maximum(h, 0.1 * h)

    # --- Dropout(0.2): identity in eval mode ---
    # TODO(synk): training-mode dropout (stateful PRNG mask) intentionally omitted.

    # --- Linear2 (BN2 pre-folded into w2/b2) + LeakyReLU(0.1) ---
    h = jnp.dot(h.astype(w2_ref.dtype), w2_ref[...],
                preferred_element_type=jnp.float32) + b2
    h = jnp.maximum(h, 0.1 * h)

    # --- Linear3 ---
    o_ref[...] = (jnp.dot(h.astype(w3_ref.dtype), w3_ref[...],
                          preferred_element_type=jnp.float32) + b3
                  ).astype(o_ref.dtype)


def _choose_tile(B, tb):
    """Pick a batch tile: multiple of 8 (or == B), capped at tb, and giving
    at least 2 grid steps when possible so v7x's 2 TensorCores both get work."""
    half = -(-B // 2)                 # ceil(B/2)
    half8 = -(-half // 8) * 8         # round up to a multiple of 8
    TB = min(tb, max(8, half8))
    if TB >= B:                       # tiny batch: single exact block
        TB = B
    return TB


def shadow_bottom_forward(x, params, *, tb=2048, use_bf16=True):
    """x: (B, 48) float32 -> (B, 128) float32.

    tb: max batch-tile rows per grid step (kept a multiple of 8). 2048 keeps
    per-step DMA/compute well above the ~0.35us grid-step overhead while the
    double-buffered tiles stay a few MiB (fits every generation's VMEM).
    use_bf16: store weights / feed MXU operands in bf16 (f32 accumulation,
    f32 bias-add & LeakyReLU). Set False for bit-tight f32 validation.
    """
    B = x.shape[0]
    mm_dtype = jnp.bfloat16 if use_bf16 else jnp.float32

    # ---- Wrapper glue: fold BatchNorm1d (eval) into the preceding Linear ----
    def bn_fold(gamma, beta, mean, var):
        scale = gamma / jnp.sqrt(var + BN_EPS)
        shift = beta - mean * scale
        return scale, shift

    s1, t1 = bn_fold(params["bn1_gamma"], params["bn1_beta"],
                     params["bn1_mean"], params["bn1_var"])
    s2, t2 = bn_fold(params["bn2_gamma"], params["bn2_beta"],
                     params["bn2_mean"], params["bn2_var"])

    w1 = (params["w1"].T * s1[None, :]).astype(mm_dtype)   # (48, 128)
    w2 = (params["w2"].T * s2[None, :]).astype(mm_dtype)   # (128, 128)
    w3 = params["w3"].T.astype(mm_dtype)                   # (128, 128)

    # Biases stay f32 (elementwise path stays f32 on all generations).
    b1 = params["b1"] * s1 + t1
    b2 = params["b2"] * s2 + t2
    b3 = params["b3"]
    bias_block = jnp.zeros((8, HIDDEN_DIM), jnp.float32)
    bias_block = bias_block.at[0].set(b1).at[1].set(b2).at[2].set(b3)

    # ---- Batch tiling: ragged grid, no host-side padding / output slicing ----
    TB = _choose_tile(B, tb)
    grid = (pl.cdiv(B, TB),)

    batch_map = lambda i: (i, 0)
    const_map = lambda i: (0, 0)

    # VMEM estimate (x + out double-buffered, lane-padded to 128) -> raise the
    # scoped limit only for very large TB (headroom for v7x 64 MiB physical /
    # v5e 16 MiB scoped default).
    tile_bytes = 2 * (TB * 128 * 4) * 2          # x + out, 2 buffers each, f32-lane-padded
    weight_bytes = 2 * (w1.size + w2.size + w3.size) * w1.dtype.itemsize + 2 * 8 * 128 * 4
    vmem_need = tile_bytes + weight_bytes
    vmem_limit = None
    if vmem_need > (24 << 20):
        vmem_limit = min(vmem_need + (8 << 20), 100 << 20)

    out = pl.pallas_call(
        _mlp_kernel,
        out_shape=jax.ShapeDtypeStruct((B, OUTPUT_DIM), jnp.float32),
        grid=grid,
        in_specs=[
            pl.BlockSpec((TB, INPUT_DIM), batch_map),            # x tile
            pl.BlockSpec((INPUT_DIM, HIDDEN_DIM), const_map),    # w1 (VMEM-resident)
            pl.BlockSpec((HIDDEN_DIM, HIDDEN_DIM), const_map),   # w2
            pl.BlockSpec((HIDDEN_DIM, OUTPUT_DIM), const_map),   # w3
            pl.BlockSpec((8, HIDDEN_DIM), const_map),            # packed biases
        ],
        out_specs=pl.BlockSpec((TB, OUTPUT_DIM), batch_map),
        compiler_params=pltpu.CompilerParams(
            dimension_semantics=("parallel",),   # batch rows are independent
            vmem_limit_bytes=vmem_limit),
    )(x, w1, w2, w3, bias_block)

    return out


def init_params(key):
    """Deterministic parameter init mirroring the module's shapes."""
    ks = jax.random.split(key, 6)

    def linear(k, fan_in, fan_out):
        bound = 1.0 / jnp.sqrt(fan_in)
        kw, kb = jax.random.split(k)
        w = jax.random.uniform(kw, (fan_out, fan_in), jnp.float32, -bound, bound)
        b = jax.random.uniform(kb, (fan_out,), jnp.float32, -bound, bound)
        return w, b

    w1, b1 = linear(ks[0], INPUT_DIM, HIDDEN_DIM)
    w2, b2 = linear(ks[1], HIDDEN_DIM, HIDDEN_DIM)
    w3, b3 = linear(ks[2], HIDDEN_DIM, OUTPUT_DIM)

    # BatchNorm: non-trivial deterministic stats/affine so the fold is exercised.
    bn1_gamma = 1.0 + 0.1 * jax.random.normal(ks[3], (HIDDEN_DIM,), jnp.float32)
    bn1_beta = 0.05 * jax.random.normal(ks[4], (HIDDEN_DIM,), jnp.float32)
    bn1_mean = 0.01 * jnp.arange(HIDDEN_DIM, dtype=jnp.float32)
    bn1_var = jnp.ones((HIDDEN_DIM,), jnp.float32) * 1.5

    bn2_gamma = 1.0 - 0.05 * jnp.cos(jnp.arange(HIDDEN_DIM, dtype=jnp.float32))
    bn2_beta = 0.02 * jnp.sin(jnp.arange(HIDDEN_DIM, dtype=jnp.float32))
    bn2_mean = -0.02 * jnp.arange(HIDDEN_DIM, dtype=jnp.float32)
    bn2_var = jnp.ones((HIDDEN_DIM,), jnp.float32) * 0.8

    return dict(w1=w1, b1=b1, w2=w2, b2=b2, w3=w3, b3=b3,
                bn1_gamma=bn1_gamma, bn1_beta=bn1_beta,
                bn1_mean=bn1_mean, bn1_var=bn1_var,
                bn2_gamma=bn2_gamma, bn2_beta=bn2_beta,
                bn2_mean=bn2_mean, bn2_var=bn2_var)


def _ref(x, p):
    """Pure-JAX f32 reference matching PyTorch eval semantics."""
    def bn(h, g, b, m, v):
        return (h - m) / jnp.sqrt(v + BN_EPS) * g + b
    h = x @ p["w1"].T + p["b1"]
    h = bn(h, p["bn1_gamma"], p["bn1_beta"], p["bn1_mean"], p["bn1_var"])
    h = jnp.where(h > 0, h, 0.1 * h)
    h = h @ p["w2"].T + p["b2"]
    h = bn(h, p["bn2_gamma"], p["bn2_beta"], p["bn2_mean"], p["bn2_var"])
    h = jnp.where(h > 0, h, 0.1 * h)
    return h @ p["w3"].T + p["b3"]


if __name__ == "__main__":
    key = jax.random.PRNGKey(0)
    k_param, k_x1, k_x2 = jax.random.split(key, 3)

    params = init_params(k_param)

    # 1) Small batch (B=16 -> two 8-row tiles, exercises the >=2-step rule).
    #    f32 path: bit-tight check against the reference.
    B = 16
    x = jax.random.normal(k_x1, (B, INPUT_DIM), jnp.float32)
    expected = _ref(x, params)

    out_f32 = jax.block_until_ready(
        shadow_bottom_forward(x, params, use_bf16=False))
    assert out_f32.shape == (B, OUTPUT_DIM) and out_f32.dtype == jnp.float32
    assert jnp.allclose(out_f32, expected, atol=1e-4, rtol=1e-4), (
        float(jnp.max(jnp.abs(out_f32 - expected))))

    #    bf16-operand path (default): looser tolerance (f32 accumulation,
    #    bf16 MXU operands).
    out_bf16 = jax.block_until_ready(shadow_bottom_forward(x, params))
    assert jnp.allclose(out_bf16, expected, atol=5e-2, rtol=5e-2), (
        float(jnp.max(jnp.abs(out_bf16 - expected))))

    # 2) Ragged batch with a small tile: exercises multi-step grid with a
    #    partial last block (no host-side padding), resident weights, and the
    #    "parallel" batch axis.
    B2 = 300
    x2 = jax.random.normal(k_x2, (B2, INPUT_DIM), jnp.float32)
    expected2 = _ref(x2, params)

    out2_f32 = jax.block_until_ready(
        shadow_bottom_forward(x2, params, tb=128, use_bf16=False))
    assert out2_f32.shape == (B2, OUTPUT_DIM)
    assert jnp.allclose(out2_f32, expected2, atol=1e-4, rtol=1e-4), (
        float(jnp.max(jnp.abs(out2_f32 - expected2))))

    out2_bf16 = jax.block_until_ready(
        shadow_bottom_forward(x2, params, tb=128))
    assert jnp.allclose(out2_bf16, expected2, atol=5e-2, rtol=5e-2), (
        float(jnp.max(jnp.abs(out2_bf16 - expected2))))

    print("KERNEL_OK")
</pallas_src>

<mosaic_0001>
module attributes {stable_mosaic.version = 11 : i64} {
  func.func @_mlp_kernel(%arg0: i32, %arg1: memref<8x48xf32, #tpu.memory_space<vmem>>, %arg2: memref<48x128xf32, #tpu.memory_space<vmem>>, %arg3: memref<128x128xf32, #tpu.memory_space<vmem>>, %arg4: memref<128x128xf32, #tpu.memory_space<vmem>>, %arg5: memref<8x128xf32, #tpu.memory_space<vmem>>, %arg6: memref<8x128xf32, #tpu.memory_space<vmem>>) attributes {dimension_semantics = [#tpu.dimension_semantics<parallel>], iteration_bounds = array<i64: 2>, scalar_prefetch = 0 : i64, scratch_operands = 0 : i64, tpu.core_type = #tpu.core_type<tc>, window_params = [{transform_indices = @transform_0, window_bounds = array<i64: 8, 48>}, {pipeline_mode = #tpu.pipeline_mode<synchronous>, transform_indices = @transform_1, window_bounds = array<i64: 48, 128>}, {pipeline_mode = #tpu.pipeline_mode<synchronous>, transform_indices = @transform_2, window_bounds = array<i64: 128, 128>}, {pipeline_mode = #tpu.pipeline_mode<synchronous>, transform_indices = @transform_3, window_bounds = array<i64: 128, 128>}, {pipeline_mode = #tpu.pipeline_mode<synchronous>, transform_indices = @transform_4, window_bounds = array<i64: 8, 128>}, {transform_indices = @transform_5, window_bounds = array<i64: 8, 128>}]} {
    %c0 = arith.constant 0 : index
    %c0_0 = arith.constant 0 : index
    %0 = vector.load %arg1[%c0, %c0_0] : memref<8x48xf32, #tpu.memory_space<vmem>>, vector<8x48xf32>
    %c0_1 = arith.constant 0 : index
    %c0_2 = arith.constant 0 : index
    %1 = vector.load %arg5[%c0_1, %c0_2] : memref<8x128xf32, #tpu.memory_space<vmem>>, vector<1x128xf32>
    %c1 = arith.constant 1 : index
    %c0_3 = arith.constant 0 : index
    %2 = vector.load %arg5[%c1, %c0_3] : memref<8x128xf32, #tpu.memory_space<vmem>>, vector<1x128xf32>
    %c2 = arith.constant 2 : index
    %c0_4 = arith.constant 0 : index
    %3 = vector.load %arg5[%c2, %c0_4] : memref<8x128xf32, #tpu.memory_space<vmem>>, vector<1x128xf32>
    %c0_5 = arith.constant 0 : index
    %c0_6 = arith.constant 0 : index
    %4 = vector.load %arg2[%c0_5, %c0_6] : memref<48x128xf32, #tpu.memory_space<vmem>>, vector<48x128xf32>
    %cst = arith.constant dense<0.000000e+00> : vector<8x128xf32>
    %5 = tpu.matmul %0, %4, %cst {dimension_numbers = #tpu.dot_dimension_numbers<[1], [0], [0], [1], [0, 0, 1, 1], [], []>} : vector<8x48xf32>, vector<48x128xf32>, vector<8x128xf32> -> vector<8x128xf32>
    %6 = vector.broadcast %1 : vector<1x128xf32> to vector<8x128xf32>
    %7 = arith.addf %5, %6 : vector<8x128xf32>
    %cst_7 = arith.constant 1.000000e-01 : f32
    %8 = vector.broadcast %cst_7 : f32 to vector<8x128xf32>
    %9 = arith.mulf %8, %7 : vector<8x128xf32>
    %10 = arith.maximumf %7, %9 : vector<8x128xf32>
    %c0_8 = arith.constant 0 : index
    %c0_9 = arith.constant 0 : index
    %11 = vector.load %arg3[%c0_8, %c0_9] : memref<128x128xf32, #tpu.memory_space<vmem>>, vector<128x128xf32>
    %cst_10 = arith.constant dense<0.000000e+00> : vector<8x128xf32>
    %12 = tpu.matmul %10, %11, %cst_10 {dimension_numbers = #tpu.dot_dimension_numbers<[1], [0], [0], [1], [0, 0, 1, 1], [], []>} : vector<8x128xf32>, vector<128x128xf32>, vector<8x128xf32> -> vector<8x128xf32>
    %13 = vector.broadcast %2 : vector<1x128xf32> to vector<8x128xf32>
    %14 = arith.addf %12, %13 : vector<8x128xf32>
    %cst_11 = arith.constant 1.000000e-01 : f32
    %15 = vector.broadcast %cst_11 : f32 to vector<8x128xf32>
    %16 = arith.mulf %15, %14 : vector<8x128xf32>
    %17 = arith.maximumf %14, %16 : vector<8x128xf32>
    %c0_12 = arith.constant 0 : index
    %c0_13 = arith.constant 0 : index
    %18 = vector.load %arg4[%c0_12, %c0_13] : memref<128x128xf32, #tpu.memory_space<vmem>>, vector<128x128xf32>
    %cst_14 = arith.constant dense<0.000000e+00> : vector<8x128xf32>
    %19 = tpu.matmul %17, %18, %cst_14 {dimension_numbers = #tpu.dot_dimension_numbers<[1], [0], [0], [1], [0, 0, 1, 1], [], []>} : vector<8x128xf32>, vector<128x128xf32>, vector<8x128xf32> -> vector<8x128xf32>
    %20 = vector.broadcast %3 : vector<1x128xf32> to vector<8x128xf32>
    %21 = arith.addf %19, %20 : vector<8x128xf32>
    %c0_15 = arith.constant 0 : index
    %c0_16 = arith.constant 0 : index
    %22 = vector.load %arg6[%c0_15, %c0_16] : memref<8x128xf32, #tpu.memory_space<vmem>>, vector<8x128xf32>
    tpu.vector_store %arg6[%c0_15, %c0_16], %21 {strides = array<i32>} : memref<8x128xf32, #tpu.memory_space<vmem>>, vector<8x128xf32>,
    return
  }
  func.func @transform_0(%arg0: i32) -> (i32, i32) {
    %c0_i32 = arith.constant 0 : i32
    %c0_i32_0 = arith.constant 0 : i32
    return %arg0, %c0_i32 : i32, i32
  }
  func.func @transform_1(%arg0: i32) -> (i32, i32) {
    %c0_i32 = arith.constant 0 : i32
    %c0_i32_0 = arith.constant 0 : i32
    %c0_i32_1 = arith.constant 0 : i32
    return %c0_i32, %c0_i32_0 : i32, i32
  }
  func.func @transform_2(%arg0: i32) -> (i32, i32) {
    %c0_i32 = arith.constant 0 : i32
    %c0_i32_0 = arith.constant 0 : i32
    %c0_i32_1 = arith.constant 0 : i32
    return %c0_i32, %c0_i32_0 : i32, i32
  }
  func.func @transform_3(%arg0: i32) -> (i32, i32) {
    %c0_i32 = arith.constant 0 : i32
    %c0_i32_0 = arith.constant 0 : i32
    %c0_i32_1 = arith.constant 0 : i32
    return %c0_i32, %c0_i32_0 : i32, i32
  }
  func.func @transform_4(%arg0: i32) -> (i32, i32) {
    %c0_i32 = arith.constant 0 : i32
    %c0_i32_0 = arith.constant 0 : i32
    %c0_i32_1 = arith.constant 0 : i32
    return %c0_i32, %c0_i32_0 : i32, i32
  }
  func.func @transform_5(%arg0: i32) -> (i32, i32) {
    %c0_i32 = arith.constant 0 : i32
    %c0_i32_0 = arith.constant 0 : i32
    return %arg0, %c0_i32 : i32, i32
  }
}

</mosaic_0001>

<llo_original>
// kernel: tpu_custom_call.1
$region0: #{tpu_custom_call.1}
  #allocation0 [shape = 'u32[]', space=smem, size = 0x4, offset = 0x4, fixed_abs, tag = 'smem constant byte address 0x4 - core index']
  #allocation1 [shape = 'u32[144,128]{1,0:T(1,128)}', space=vmem, size = 0x12000, scoped, tag = 'internal scratch']
  %s0 = inlined_call_operand.hbm [shape: f32[16,48], index: 0, kind: input, shape index: {}]
  %s1 = inlined_call_operand.hbm [shape: f32[48,128], index: 1, kind: input, shape index: {}]
  %s2 = inlined_call_operand.hbm [shape: f32[128,128], index: 2, kind: input, shape index: {}]
  %s3 = inlined_call_operand.hbm [shape: f32[128,128], index: 3, kind: input, shape index: {}]
  %s4 = inlined_call_operand.vmem [shape: f32[8,128], index: 4, kind: input, shape index: {}]
  %s5 = inlined_call_operand.hbm [shape: f32[16,128], index: 5, kind: output, shape index: {}]
  %s6 = sld [smem:[#allocation0]]
  $region69: #{tpu_custom_call.1} parent=0
    _
  %s8 = ssub.s32 1, %s6
  %s9 = scalar_select 0, %s8, %s6
  $region1: #{tpu_custom_call.1} parent=0
    #allocation2 [shape = 'u8[8192]{0}', space=vmem, size = 0x2000, scoped, tag = 'input window, operand 0']
    #allocation3 [shape = 's32[2]{0}', space=sflag, size = 0x8, scoped, tag = 'scoped memory for tpu_custom_call.1']
    #allocation4 [shape = 's32[2]{0}', space=sflag, size = 0x8, scoped, tag = 'scoped memory for tpu_custom_call.1']
    #allocation5 [shape = 'u8[24576]{0}', space=vmem, size = 0x6000, scoped, tag = 'input window, operand 1, single buffered']
    #allocation6 [shape = 's32[1]{0}', space=sflag, size = 0x4, scoped, tag = 'scoped memory for tpu_custom_call.1']
    #allocation7 [shape = 'u8[65536]{0}', space=vmem, size = 0x10000, scoped, tag = 'input window, operand 2, single buffered']
    #allocation8 [shape = 'u8[65536]{0}', space=vmem, size = 0x10000, scoped, tag = 'input window, operand 3, single buffered']
    #allocation9 [shape = 's32[1]{0}', space=sflag, size = 0x4, scoped, tag = 'scoped memory for tpu_custom_call.1']
    #allocation10 [shape = 'u8[8192]{0}', space=vmem, size = 0x2000, scoped, tag = 'output window, operand 0']
    %10 = vsyncpa [#allocation3], 0
    %s11 = scalar_lea.sflag [#allocation3], 1
    %12 = vsyncpa %s11, 0
    %13 = vsyncpa [#allocation6], 0
    %14 = vsyncpa [#allocation9], 0
    %15 = vsyncpa [#allocation4], 0
    %s16 = scalar_lea.sflag [#allocation4], 1
    %17 = vsyncpa %s16, 0
    loop: start=0, step=1, limit=4
    $region2: #{tpu_custom_call.1} parent=1 // loop_pre_header
      _
    $region3: #{tpu_custom_call.1} parent=1 // loop_header
      %s19 = sphi 0, %s23
      %p20 = scmp.ge.s32.totalorder %s19, 4
      %s29 = sphi 0, %s31
      %s32 = sphi 0, %s29
      %s33 = sphi 0, %s32
      %s49 = sphi 0, %s33
      %s53 = sphi 0, %s53
      %s55 = sphi 0, %s53
      %s56 = sphi 0, %s55
      %s70 = sphi 0, %s56
      %s74 = sphi 0, %s74
      %s76 = sphi 0, %s74
      %s77 = sphi 0, %s76
      %s91 = sphi 0, %s77
      %s95 = sphi 0, %s95
      %s97 = sphi 0, %s95
      %s98 = sphi 0, %s97
      %s112 = sphi 0, %s98
      %s116 = sphi 0, %s116
      %s118 = sphi 0, %s116
      %s119 = sphi 0, %s118
      %s133 = sphi 0, %s119
      %s139 = sphi 0, %s141
      %s142 = sphi 0, %s139
      %s143 = sphi 0, %s142
      %s159 = sphi 0, %s143
    $region4: #{tpu_custom_call.1} parent=1 // loop_header_branch
      %22 = sbr.rel (%p20) target = $region8
    $region5: #{tpu_custom_call.1} parent=1 // loop_body
      %s24 = ssub.s32 %s19, 1
      %s25 = ssub.s32 %s19, 2
      %s26 = sadd.s32 %s19, 1
      %s27 = ssub.s32 %s19, %s26
      %p28 = scmp.eq.s32.totalorder %s27, 0
      %s30 = sadd.s32 %s29, 1
      %s31 = scalar_select %p28, %s29, %s30
      %p34 = pneg %p28
      %p35 = scmp.eq.s32.totalorder %s19, 1
      %p36 = por %p34, %p35
      %p37 = scmp.ne.s32.totalorder %s29, %s32
      %p38 = scmp.eq.s32.totalorder %s19, 0
      %p39 = por %p37, %p38
      %p40 = scmp.ne.s32.totalorder %s29, %s32
      %p41 = scmp.eq.s32.totalorder %s24, 1
      %p42 = por %p40, %p41
      %p43 = scmp.ne.s32.totalorder %s32, %s33
      %p44 = scmp.eq.s32.totalorder %s24, 0
      %p45 = por %p43, %p44
      %p46 = scmp.ne.s32.totalorder %s32, %s33
      %p47 = scmp.eq.s32.totalorder %s25, 1
      %p48 = por %p46, %p47
      %p50 = scmp.ne.s32.totalorder %s33, %s49
      %p51 = scmp.eq.s32.totalorder %s25, 0
      %p52 = por %p50, %p51
      %s54 = sadd.s32 %s53, 1
      %p57 = scmp.eq.s32.totalorder %s19, 1
      %p58 = scmp.ne.s32.totalorder %s53, %s55
      %p59 = scmp.eq.s32.totalorder %s19, 0
      %p60 = por %p58, %p59
      %p61 = scmp.ne.s32.totalorder %s53, %s55
      %p62 = scmp.eq.s32.totalorder %s24, 1
      %p63 = por %p61, %p62
      %p64 = scmp.ne.s32.totalorder %s55, %s56
      %p65 = scmp.eq.s32.totalorder %s24, 0
      %p66 = por %p64, %p65
      %p67 = scmp.ne.s32.totalorder %s55, %s56
      %p68 = scmp.eq.s32.totalorder %s25, 1
      %p69 = por %p67, %p68
      %p71 = scmp.ne.s32.totalorder %s56, %s70
      %p72 = scmp.eq.s32.totalorder %s25, 0
      %p73 = por %p71, %p72
      %s75 = sadd.s32 %s74, 1
      %p78 = scmp.eq.s32.totalorder %s19, 1
      %p79 = scmp.ne.s32.totalorder %s74, %s76
      %p80 = scmp.eq.s32.totalorder %s19, 0
      %p81 = por %p79, %p80
      %p82 = scmp.ne.s32.totalorder %s74, %s76
      %p83 = scmp.eq.s32.totalorder %s24, 1
      %p84 = por %p82, %p83
      %p85 = scmp.ne.s32.totalorder %s76, %s77
      %p86 = scmp.eq.s32.totalorder %s24, 0
      %p87 = por %p85, %p86
      %p88 = scmp.ne.s32.totalorder %s76, %s77
      %p89 = scmp.eq.s32.totalorder %s25, 1
      %p90 = por %p88, %p89
      %p92 = scmp.ne.s32.totalorder %s77, %s91
      %p93 = scmp.eq.s32.totalorder %s25, 0
      %p94 = por %p92, %p93
      %s96 = sadd.s32 %s95, 1
      %p99 = scmp.eq.s32.totalorder %s19, 1
      %p100 = scmp.ne.s32.totalorder %s95, %s97
      %p101 = scmp.eq.s32.totalorder %s19, 0
      %p102 = por %p100, %p101
      %p103 = scmp.ne.s32.totalorder %s95, %s97
      %p104 = scmp.eq.s32.totalorder %s24, 1
      %p105 = por %p103, %p104
      %p106 = scmp.ne.s32.totalorder %s97, %s98
      %p107 = scmp.eq.s32.totalorder %s24, 0
      %p108 = por %p106, %p107
      %p109 = scmp.ne.s32.totalorder %s97, %s98
      %p110 = scmp.eq.s32.totalorder %s25, 1
      %p111 = por %p109, %p110
      %p113 = scmp.ne.s32.totalorder %s98, %s112
      %p114 = scmp.eq.s32.totalorder %s25, 0
      %p115 = por %p113, %p114
      %s117 = sadd.s32 %s116, 1
      %p120 = scmp.eq.s32.totalorder %s19, 1
      %p121 = scmp.ne.s32.totalorder %s116, %s118
      %p122 = scmp.eq.s32.totalorder %s19, 0
      %p123 = por %p121, %p122
      %p124 = scmp.ne.s32.totalorder %s116, %s118
      %p125 = scmp.eq.s32.totalorder %s24, 1
      %p126 = por %p124, %p125
      %p127 = scmp.ne.s32.totalorder %s118, %s119
      %p128 = scmp.eq.s32.totalorder %s24, 0
      %p129 = por %p127, %p128
      %p130 = scmp.ne.s32.totalorder %s118, %s119
      %p131 = scmp.eq.s32.totalorder %s25, 1
      %p132 = por %p130, %p131
      %p134 = scmp.ne.s32.totalorder %s119, %s133
      %p135 = scmp.eq.s32.totalorder %s25, 0
      %p136 = por %p134, %p135
      %s137 = ssub.s32 %s19, %s26
      %p138 = scmp.eq.s32.totalorder %s137, 0
      %s140 = sadd.s32 %s139, 1
      %s141 = scalar_select %p138, %s139, %s140
      %p144 = pneg %p138
      %p145 = scmp.eq.s32.totalorder %s19, 1
      %p146 = por %p144, %p145
      %p147 = scmp.ne.s32.totalorder %s139, %s142
      %p148 = scmp.eq.s32.totalorder %s19, 0
      %p149 = por %p147, %p148
      %p150 = scmp.ne.s32.totalorder %s139, %s142
      %p151 = scmp.eq.s32.totalorder %s24, 1
      %p152 = por %p150, %p151
      %p153 = scmp.ne.s32.totalorder %s142, %s143
      %p154 = scmp.eq.s32.totalorder %s24, 0
      %p155 = por %p153, %p154
      %p156 = scmp.ne.s32.totalorder %s142, %s143
      %p157 = scmp.eq.s32.totalorder %s25, 1
      %p158 = por %p156, %p157
      %p160 = scmp.ne.s32.totalorder %s143, %s159
      %p161 = scmp.eq.s32.totalorder %s25, 0
      %p162 = por %p160, %p161
      %p163 = scmp.le.s32.totalorder 1, %s19
      %p164 = scmp.lt.s32.totalorder %s19, 3
      %p165 = pnand %p163, %p164
      %p166 = pneg %p165
      // Predicated region
      $region9: #{tpu_custom_call.1} parent=5 // pred_check
        _
      $region10: #{tpu_custom_call.1} parent=5 // pred_check_branch
        %168 = sbr.rel (%p165) target = $region12
      $region11: #{tpu_custom_call.1} parent=5 // pred_region
        %s169 = ssub.s32 %s19, 1
        // Predicated region
        $region13: #{tpu_custom_call.1} parent=11 // pred_check
          %p170 = pneg %p66
        $region14: #{tpu_custom_call.1} parent=11 // pred_check_branch
          %172 = sbr.rel (%p170) target = $region16
        $region15: #{tpu_custom_call.1} parent=11 // pred_region
          %s174 = ssub.s32 768, 768
          %175 = vsyncadd [#allocation6], %s174
          %s176 = sshll.u32 [#allocation5], 4
          %s177 = int_to_ptr.vmem [resolvable:$true] %s176
          %182 = dma.hbm_to_vmem [thread:$0]  %s1, 768, %s177, [#allocation6], 128, 128, 8
        $region16: #{tpu_custom_call.1} parent=11 // pred_fallthru
          _
        // Predicated region
        $region17: #{tpu_custom_call.1} parent=11 // pred_check
          %p183 = pneg %p87
        $region18: #{tpu_custom_call.1} parent=11 // pred_check_branch
          %185 = sbr.rel (%p183) target = $region20
        $region19: #{tpu_custom_call.1} parent=11 // pred_region
          %s187 = ssub.s32 2048, 2048
          %188 = vsyncadd [#allocation6], %s187
          %s189 = sshll.u32 [#allocation7], 4
          %s190 = int_to_ptr.vmem [resolvable:$true] %s189
          %195 = dma.hbm_to_vmem [thread:$0]  %s2, 2048, %s190, [#allocation6], 128, 128, 8
        $region20: #{tpu_custom_call.1} parent=11 // pred_fallthru
          _
        // Predicated region
        $region21: #{tpu_custom_call.1} parent=11 // pred_check
          %p196 = pneg %p108
        $region22: #{tpu_custom_call.1} parent=11 // pred_check_branch
          %198 = sbr.rel (%p196) target = $region24
        $region23: #{tpu_custom_call.1} parent=11 // pred_region
          %s200 = ssub.s32 2048, 2048
          %201 = vsyncadd [#allocation9], %s200
          %s202 = sshll.u32 [#allocation8], 4
          %s203 = int_to_ptr.vmem [resolvable:$true] %s202
          %208 = dma.hbm_to_vmem [thread:$0]  %s3, 2048, %s203, [#allocation9], 128, 128, 8
        $region24: #{tpu_custom_call.1} parent=11 // pred_fallthru
          _
        // Predicated region
        $region25: #{tpu_custom_call.1} parent=11 // pred_check
          %p209 = pneg %p129
        $region26: #{tpu_custom_call.1} parent=11 // pred_check_branch
          %211 = sbr.rel (%p209) target = $region28
        $region27: #{tpu_custom_call.1} parent=11 // pred_region
          _
        $region28: #{tpu_custom_call.1} parent=11 // pred_fallthru
          _
      $region12: #{tpu_custom_call.1} parent=5 // pred_fallthru
        _
      %p212 = scmp.lt.s32.totalorder %s19, 2
      // Predicated region
      $region29: #{tpu_custom_call.1} parent=5 // pred_check
        %p213 = pneg %p212
      $region30: #{tpu_custom_call.1} parent=5 // pred_check_branch
        %215 = sbr.rel (%p213) target = $region32
      $region31: #{tpu_custom_call.1} parent=5 // pred_region
        // Predicated region
        $region33: #{tpu_custom_call.1} parent=31 // pred_check
          %p216 = pneg %p39
        $region34: #{tpu_custom_call.1} parent=31 // pred_check_branch
          %218 = sbr.rel (%p216) target = $region36
        $region35: #{tpu_custom_call.1} parent=31 // pred_region
          %s219 = sand.u32 %s29, 1
          %s220 = scalar_lea.sflag [#allocation3], %s219
          %s221 = sand.u32 %s29, 1
          %s222 = smul.addr %s221, 8
          %s223 = scalar_lea.vmem [#allocation2], %s222
          %s225 = ssub.s32 128, 128
          %226 = vsyncadd %s220, %s225
          %s227 = smul.addr %s19, 128
          %s228 = scalar_lea.hbm %s0, %s227
          %s230 = sshll.u32 %s223, 4
          %s231 = int_to_ptr.vmem [resolvable:$true] %s230
          %233 = dma.hbm_to_vmem [thread:$0]  %s228, 128, %s231, %s220
        $region36: #{tpu_custom_call.1} parent=31 // pred_fallthru
          _
      $region32: #{tpu_custom_call.1} parent=5 // pred_fallthru
        _
      %p234 = scmp.le.s32.totalorder 1, %s19
      %p235 = scmp.lt.s32.totalorder %s19, 3
      %p236 = pnand %p234, %p235
      %p237 = pneg %p236
      // Predicated region
      $region37: #{tpu_custom_call.1} parent=5 // pred_check
        _
      $region38: #{tpu_custom_call.1} parent=5 // pred_check_branch
        %239 = sbr.rel (%p236) target = $region40
      $region39: #{tpu_custom_call.1} parent=5 // pred_region
        %s240 = ssub.s32 %s19, 1
        %s241 = sand.u32 %s32, 1
        %s242 = scalar_lea.sflag [#allocation3], %s241
        %s243 = sand.u32 %s32, 1
        %s244 = smul.addr %s243, 8
        %s245 = scalar_lea.vmem [#allocation2], %s244
        // Predicated region
        $region41: #{tpu_custom_call.1} parent=39 // pred_check
          %p246 = pneg %p45
        $region42: #{tpu_custom_call.1} parent=39 // pred_check_branch
          %248 = sbr.rel (%p246) target = $region44
        $region43: #{tpu_custom_call.1} parent=39 // pred_region
          %249 = dma.done %s242, 128
        $region44: #{tpu_custom_call.1} parent=39 // pred_fallthru
          _
        // Predicated region
        $region45: #{tpu_custom_call.1} parent=39 // pred_check
          %p250 = pneg %p66
        $region46: #{tpu_custom_call.1} parent=39 // pred_check_branch
          %252 = sbr.rel (%p250) target = $region48
        $region47: #{tpu_custom_call.1} parent=39 // pred_region
          %253 = dma.done [#allocation6], 768
        $region48: #{tpu_custom_call.1} parent=39 // pred_fallthru
          _
        // Predicated region
        $region49: #{tpu_custom_call.1} parent=39 // pred_check
          %p254 = pneg %p87
        $region50: #{tpu_custom_call.1} parent=39 // pred_check_branch
          %256 = sbr.rel (%p254) target = $region52
        $region51: #{tpu_custom_call.1} parent=39 // pred_region
          %257 = dma.done [#allocation6], 2048
        $region52: #{tpu_custom_call.1} parent=39 // pred_fallthru
          _
        // Predicated region
        $region53: #{tpu_custom_call.1} parent=39 // pred_check
          %p258 = pneg %p108
        $region54: #{tpu_custom_call.1} parent=39 // pred_check_branch
          %260 = sbr.rel (%p258) target = $region56
        $region55: #{tpu_custom_call.1} parent=39 // pred_region
          %261 = dma.done [#allocation9], 2048
        $region56: #{tpu_custom_call.1} parent=39 // pred_fallthru
          _
        %s262 = sand.u32 %s32, 1
        %s263 = scalar_lea.sflag [#allocation3], %s262
        %s264 = sand.u32 %s32, 1
        %s265 = smul.addr %s264, 8
        %s266 = scalar_lea.vmem [#allocation2], %s265
        %p267 = pneg %p45
        %p268 = pneg %p42
        %p269 = pneg %p66
        %p270 = pneg %p63
        %p271 = pneg %p87
        %p272 = pneg %p84
        %p273 = pneg %p108
        %p274 = pneg %p105
        %p275 = pneg %p129
        %p276 = pneg %p126
        %p277 = pneg %p155
        %p278 = pneg %p152
        %s279 = sand.u32 %s142, 1
        %s280 = scalar_lea.sflag [#allocation4], %s279
        %s281 = sand.u32 %s142, 1
        %s282 = smul.addr %s281, 8
        %s283 = scalar_lea.vmem [#allocation10], %s282
        %v284 = vld [vmem:[%s245] sm:$0xff]
        %v285 = vld [vmem:[%s4] sm:$0x1]
        %v286 = vld [vmem:[%s4 + $0x1] sm:$0x1]
        %v287 = vld [vmem:[%s4 + $0x2] sm:$0x1]
        %v288 = vld [vmem:[#allocation5] sm:$0xff]
        %v289 = vld [vmem:[#allocation5 + $0x8] sm:$0xff]
        %v290 = vld [vmem:[#allocation5 + $0x10] sm:$0xff]
        %v291 = vld [vmem:[#allocation5 + $0x18] sm:$0xff]
        %v292 = vld [vmem:[#allocation5 + $0x20] sm:$0xff]
        %v293 = vld [vmem:[#allocation5 + $0x28] sm:$0xff]
        %v294 = vlaneseq
        %v295 = vshrl.u32 %v294, 7
        %v296 = vsub.s32 0, %v295
        %v297 = vrot.slane %v285, %v296
        %vm298 = vcmask 392192
        %v300 = vsel %vm298, %v284, 0
        %302 = vmatprep.subr.mxu0 0.0
        %303 = vmatpush1.msra.mxu0 %v288
        %304 = vmatprep.subr.mxu0 0.0
        %305 = vmatpush1.msra.mxu0 %v289
        %306 = vmatprep.subr.mxu0 0.0
        %307 = vmatpush1.msra.mxu0 %v290
        %308 = vmatprep.subr.mxu0 0.0
        %309 = vmatpush1.msra.mxu0 %v291
        %310 = vmatprep.subr.mxu0 0.0
        %311 = vmatpush1.msra.mxu0 %v292
        %312 = vmatprep.subr.mxu0 0.0
        %313 = vmatpush1.msra.mxu0 %v293
        %314 = vmatprep.subr.mxu0 0.0
        %315 = vmatpush1.msra.mxu0 0.0
        %316 = vmatprep.subr.mxu0 0.0
        %317 = vmatpush1.msra.mxu0 0.0
        %318 = vmatprep.subr.mxu0 0.0
        %319 = vmatpush1.msra.mxu0 0.0
        %320 = vmatprep.subr.mxu0 0.0
        %321 = vmatpush1.msra.mxu0 0.0
        %322 = vmatprep.subr.mxu0 0.0
        %323 = vmatpush1.msra.mxu0 0.0
        %324 = vmatprep.subr.mxu0 0.0
        %325 = vmatpush1.msra.mxu0 0.0
        %326 = vmatprep.subr.mxu0 0.0
        %327 = vmatpush1.msra.mxu0 0.0
        %328 = vmatprep.subr.mxu0 0.0
        %329 = vmatpush1.msra.mxu0 0.0
        %330 = vmatprep.subr.mxu0 0.0
        %331 = vmatpush1.msra.mxu0 0.0
        %332 = vmatprep.subr.mxu0 0.0
        %333 = vmatpush1.msra.mxu0 0.0
        %334 = vmatprep.subr.mxu0 0.0
        %335 = vmatpush1.msra.mxu0 0.0
        %336 = vmatprep.subr.mxu0 0.0
        %337 = vmatpush1.msra.mxu0 0.0
        %338 = vmatprep.subr.mxu0 0.0
        %339 = vmatpush1.msra.mxu0 0.0
        %340 = vmatprep.subr.mxu0 0.0
        %341 = vmatpush1.msra.mxu0 0.0
        %342 = vmatprep.subr.mxu0 0.0
        %343 = vmatpush1.msra.mxu0 0.0
        %344 = vmatprep.subr.mxu0 0.0
        %345 = vmatpush1.msra.mxu0 0.0
        %346 = vmatprep.subr.mxu0 0.0
        %347 = vmatpush1.msra.mxu0 0.0
        %348 = vmatprep.subr.mxu0 0.0
        %349 = vmatpush1.msra.mxu0 0.0
        %350 = vmatprep.subr.mxu0 0.0
        %351 = vmatpush1.msra.mxu0 0.0
        %352 = vmatprep.subr.mxu0 0.0
        %353 = vmatpush1.msra.mxu0 0.0
        %354 = vmatprep.subr.mxu0 0.0
        %355 = vmatpush1.msra.mxu0 0.0
        %356 = vmatprep.subr.mxu0 0.0
        %357 = vmatpush1.msra.mxu0 0.0
        %358 = vmatprep.subr.mxu0 0.0
        %359 = vmatpush1.msra.mxu0 0.0
        %360 = vmatprep.subr.mxu0 0.0
        %361 = vmatpush1.msra.mxu0 0.0
        %362 = vmatprep.subr.mxu0 0.0
        %363 = vmatpush1.msra.mxu0 0.0
        %364 = vmatprep.subr.mxu0 0.0
        %365 = vmatpush1.msra.mxu0 0.0
        %366 = vmatprep.mubr.f32.mxu0 0.0
        %367 = vmatmul.mubr.f32.gmra.mrb[0].mxu0 %v300
        %v368 = vpop.f32.mrb[0].mxu0
        %v369 = vadd.f32 %v297, %v368
        %v370 = vpop.f32.mrb[0].mxu0
        %371 = vdwg.mxu0
        %v372 = vmul.f32 %v369, 0.1
        %v373 = vmax.f32 %v369, %v372
        %v374 = vld [vmem:[#allocation7] sm:$0xff]
        %v375 = vld [vmem:[#allocation7 + $0x8] sm:$0xff]
        %v376 = vld [vmem:[#allocation7 + $0x10] sm:$0xff]
        %v377 = vld [vmem:[#allocation7 + $0x18] sm:$0xff]
        %v378 = vld [vmem:[#allocation7 + $0x20] sm:$0xff]
        %v379 = vld [vmem:[#allocation7 + $0x28] sm:$0xff]
        %v380 = vld [vmem:[#allocation7 + $0x30] sm:$0xff]
        %v381 = vld [vmem:[#allocation7 + $0x38] sm:$0xff]
        %v382 = vld [vmem:[#allocation7 + $0x40] sm:$0xff]
        %v383 = vld [vmem:[#allocation7 + $0x48] sm:$0xff]
        %v384 = vld [vmem:[#allocation7 + $0x50] sm:$0xff]
        %v385 = vld [vmem:[#allocation7 + $0x58] sm:$0xff]
        %v386 = vld [vmem:[#allocation7 + $0x60] sm:$0xff]
        %v387 = vld [vmem:[#allocation7 + $0x68] sm:$0xff]
        %v388 = vld [vmem:[#allocation7 + $0x70] sm:$0xff]
        %v389 = vld [vmem:[#allocation7 + $0x78] sm:$0xff]
        %v390 = vlaneseq
        %v391 = vshrl.u32 %v390, 7
        %v392 = vsub.s32 0, %v391
        %v393 = vrot.slane %v286, %v392
        %394 = vmatprep.subr.mxu0 0.0
        %395 = vmatpush1.msra.mxu0 %v374
        %396 = vmatprep.subr.mxu0 0.0
        %397 = vmatpush1.msra.mxu0 %v375
        %398 = vmatprep.subr.mxu0 0.0
        %399 = vmatpush1.msra.mxu0 %v376
        %400 = vmatprep.subr.mxu0 0.0
        %401 = vmatpush1.msra.mxu0 %v377
        %402 = vmatprep.subr.mxu0 0.0
        %403 = vmatpush1.msra.mxu0 %v378
        %404 = vmatprep.subr.mxu0 0.0
        %405 = vmatpush1.msra.mxu0 %v379
        %406 = vmatprep.subr.mxu0 0.0
        %407 = vmatpush1.msra.mxu0 %v380
        %408 = vmatprep.subr.mxu0 0.0
        %409 = vmatpush1.msra.mxu0 %v381
        %410 = vmatprep.subr.mxu0 0.0
        %411 = vmatpush1.msra.mxu0 %v382
        %412 = vmatprep.subr.mxu0 0.0
        %413 = vmatpush1.msra.mxu0 %v383
        %414 = vmatprep.subr.mxu0 0.0
        %415 = vmatpush1.msra.mxu0 %v384
        %416 = vmatprep.subr.mxu0 0.0
        %417 = vmatpush1.msra.mxu0 %v385
        %418 = vmatprep.subr.mxu0 0.0
        %419 = vmatpush1.msra.mxu0 %v386
        %420 = vmatprep.subr.mxu0 0.0
        %421 = vmatpush1.msra.mxu0 %v387
        %422 = vmatprep.subr.mxu0 0.0
        %423 = vmatpush1.msra.mxu0 %v388
        %424 = vmatprep.subr.mxu0 0.0
        %425 = vmatpush1.msra.mxu0 %v389
        %426 = vmatprep.subr.mxu0 0.0
        %427 = vmatpush1.msra.mxu0 0.0
        %428 = vmatprep.subr.mxu0 0.0
        %429 = vmatpush1.msra.mxu0 0.0
        %430 = vmatprep.subr.mxu0 0.0
        %431 = vmatpush1.msra.mxu0 0.0
        %432 = vmatprep.subr.mxu0 0.0
        %433 = vmatpush1.msra.mxu0 0.0
        %434 = vmatprep.subr.mxu0 0.0
        %435 = vmatpush1.msra.mxu0 0.0
        %436 = vmatprep.subr.mxu0 0.0
        %437 = vmatpush1.msra.mxu0 0.0
        %438 = vmatprep.subr.mxu0 0.0
        %439 = vmatpush1.msra.mxu0 0.0
        %440 = vmatprep.subr.mxu0 0.0
        %441 = vmatpush1.msra.mxu0 0.0
        %442 = vmatprep.subr.mxu0 0.0
        %443 = vmatpush1.msra.mxu0 0.0
        %444 = vmatprep.subr.mxu0 0.0
        %445 = vmatpush1.msra.mxu0 0.0
        %446 = vmatprep.subr.mxu0 0.0
        %447 = vmatpush1.msra.mxu0 0.0
        %448 = vmatprep.subr.mxu0 0.0
        %449 = vmatpush1.msra.mxu0 0.0
        %450 = vmatprep.subr.mxu0 0.0
        %451 = vmatpush1.msra.mxu0 0.0
        %452 = vmatprep.subr.mxu0 0.0
        %453 = vmatpush1.msra.mxu0 0.0
        %454 = vmatprep.subr.mxu0 0.0
        %455 = vmatpush1.msra.mxu0 0.0
        %456 = vmatprep.subr.mxu0 0.0
        %457 = vmatpush1.msra.mxu0 0.0
        %458 = vmatprep.mubr.f32.mxu0 0.0
        %459 = vmatmul.mubr.f32.gmra.mrb[0].mxu0 %v373
        %v460 = vpop.f32.mrb[0].mxu0
        %v461 = vadd.f32 %v393, %v460
        %v462 = vpop.f32.mrb[0].mxu0
        %463 = vdwg.mxu0
        %v464 = vmul.f32 %v461, 0.1
        %v465 = vmax.f32 %v461, %v464
        %v466 = vld [vmem:[#allocation8] sm:$0xff]
        %v467 = vld [vmem:[#allocation8 + $0x8] sm:$0xff]
        %v468 = vld [vmem:[#allocation8 + $0x10] sm:$0xff]
        %v469 = vld [vmem:[#allocation8 + $0x18] sm:$0xff]
        %v470 = vld [vmem:[#allocation8 + $0x20] sm:$0xff]
        %v471 = vld [vmem:[#allocation8 + $0x28] sm:$0xff]
        %v472 = vld [vmem:[#allocation8 + $0x30] sm:$0xff]
        %v473 = vld [vmem:[#allocation8 + $0x38] sm:$0xff]
        %v474 = vld [vmem:[#allocation8 + $0x40] sm:$0xff]
        %v475 = vld [vmem:[#allocation8 + $0x48] sm:$0xff]
        %v476 = vld [vmem:[#allocation8 + $0x50] sm:$0xff]
        %v477 = vld [vmem:[#allocation8 + $0x58] sm:$0xff]
        %v478 = vld [vmem:[#allocation8 + $0x60] sm:$0xff]
        %v479 = vld [vmem:[#allocation8 + $0x68] sm:$0xff]
        %v480 = vld [vmem:[#allocation8 + $0x70] sm:$0xff]
        %v481 = vld [vmem:[#allocation8 + $0x78] sm:$0xff]
        %v482 = vlaneseq
        %v483 = vshrl.u32 %v482, 7
        %v484 = vsub.s32 0, %v483
        %v485 = vrot.slane %v287, %v484
        %486 = vmatprep.subr.mxu0 0.0
        %487 = vmatpush1.msra.mxu0 %v466
        %488 = vmatprep.subr.mxu0 0.0
        %489 = vmatpush1.msra.mxu0 %v467
        %490 = vmatprep.subr.mxu0 0.0
        %491 = vmatpush1.msra.mxu0 %v468
        %492 = vmatprep.subr.mxu0 0.0
        %493 = vmatpush1.msra.mxu0 %v469
        %494 = vmatprep.subr.mxu0 0.0
        %495 = vmatpush1.msra.mxu0 %v470
        %496 = vmatprep.subr.mxu0 0.0
        %497 = vmatpush1.msra.mxu0 %v471
        %498 = vmatprep.subr.mxu0 0.0
        %499 = vmatpush1.msra.mxu0 %v472
        %500 = vmatprep.subr.mxu0 0.0
        %501 = vmatpush1.msra.mxu0 %v473
        %502 = vmatprep.subr.mxu0 0.0
        %503 = vmatpush1.msra.mxu0 %v474
        %504 = vmatprep.subr.mxu0 0.0
        %505 = vmatpush1.msra.mxu0 %v475
        %506 = vmatprep.subr.mxu0 0.0
        %507 = vmatpush1.msra.mxu0 %v476
        %508 = vmatprep.subr.mxu0 0.0
        %509 = vmatpush1.msra.mxu0 %v477
        %510 = vmatprep.subr.mxu0 0.0
        %511 = vmatpush1.msra.mxu0 %v478
        %512 = vmatprep.subr.mxu0 0.0
        %513 = vmatpush1.msra.mxu0 %v479
        %514 = vmatprep.subr.mxu0 0.0
        %515 = vmatpush1.msra.mxu0 %v480
        %516 = vmatprep.subr.mxu0 0.0
        %517 = vmatpush1.msra.mxu0 %v481
        %518 = vmatprep.subr.mxu0 0.0
        %519 = vmatpush1.msra.mxu0 0.0
        %520 = vmatprep.subr.mxu0 0.0
        %521 = vmatpush1.msra.mxu0 0.0
        %522 = vmatprep.subr.mxu0 0.0
        %523 = vmatpush1.msra.mxu0 0.0
        %524 = vmatprep.subr.mxu0 0.0
        %525 = vmatpush1.msra.mxu0 0.0
        %526 = vmatprep.subr.mxu0 0.0
        %527 = vmatpush1.msra.mxu0 0.0
        %528 = vmatprep.subr.mxu0 0.0
        %529 = vmatpush1.msra.mxu0 0.0
        %530 = vmatprep.subr.mxu0 0.0
        %531 = vmatpush1.msra.mxu0 0.0
        %532 = vmatprep.subr.mxu0 0.0
        %533 = vmatpush1.msra.mxu0 0.0
        %534 = vmatprep.subr.mxu0 0.0
        %535 = vmatpush1.msra.mxu0 0.0
        %536 = vmatprep.subr.mxu0 0.0
        %537 = vmatpush1.msra.mxu0 0.0
        %538 = vmatprep.subr.mxu0 0.0
        %539 = vmatpush1.msra.mxu0 0.0
        %540 = vmatprep.subr.mxu0 0.0
        %541 = vmatpush1.msra.mxu0 0.0
        %542 = vmatprep.subr.mxu0 0.0
        %543 = vmatpush1.msra.mxu0 0.0
        %544 = vmatprep.subr.mxu0 0.0
        %545 = vmatpush1.msra.mxu0 0.0
        %546 = vmatprep.subr.mxu0 0.0
        %547 = vmatpush1.msra.mxu0 0.0
        %548 = vmatprep.subr.mxu0 0.0
        %549 = vmatpush1.msra.mxu0 0.0
        %550 = vmatprep.mubr.f32.mxu0 0.0
        %551 = vmatmul.mubr.f32.gmra.mrb[0].mxu0 %v465
        %v552 = vpop.f32.mrb[0].mxu0
        %v553 = vadd.f32 %v485, %v552
        %v554 = vpop.f32.mrb[0].mxu0
        %555 = vdwg.mxu0
        %556 = vst [vmem:[%s283] sm:$0xff] %v553
        %s557 = sand.u32 %s142, 1
        %s558 = scalar_lea.sflag [#allocation4], %s557
        %s559 = sand.u32 %s142, 1
        %s560 = smul.addr %s559, 8
        %s561 = scalar_lea.vmem [#allocation10], %s560
        // Predicated region
        $region57: #{tpu_custom_call.1} parent=39 // pred_check
          %p562 = pneg %p152
        $region58: #{tpu_custom_call.1} parent=39 // pred_check_branch
          %564 = sbr.rel (%p562) target = $region60
        $region59: #{tpu_custom_call.1} parent=39 // pred_region
          %s566 = ssub.s32 128, 128
          %567 = vsyncadd %s558, %s566
          %s568 = smul.addr %s24, 128
          %s569 = scalar_lea.hbm %s5, %s568
          %s571 = sshll.u32 %s561, 4
          %s572 = int_to_ptr.vmem [resolvable:$true] %s571
          %574 = dma.vmem_to_hbm [thread:$0]  %s572, 128, %s569, %s558
        $region60: #{tpu_custom_call.1} parent=39 // pred_fallthru
          _
      $region40: #{tpu_custom_call.1} parent=5 // pred_fallthru
        _
      %p575 = scmp.le.s32.totalorder 2, %s19
      // Predicated region
      $region61: #{tpu_custom_call.1} parent=5 // pred_check
        %p576 = pneg %p575
      $region62: #{tpu_custom_call.1} parent=5 // pred_check_branch
        %578 = sbr.rel (%p576) target = $region64
      $region63: #{tpu_custom_call.1} parent=5 // pred_region
        %s579 = ssub.s32 %s19, 2
        // Predicated region
        $region65: #{tpu_custom_call.1} parent=63 // pred_check
          %p580 = pneg %p158
        $region66: #{tpu_custom_call.1} parent=63 // pred_check_branch
          %582 = sbr.rel (%p580) target = $region68
        $region67: #{tpu_custom_call.1} parent=63 // pred_region
          %s583 = sand.u32 %s143, 1
          %s584 = scalar_lea.sflag [#allocation4], %s583
          %s585 = sand.u32 %s143, 1
          %s586 = smul.addr %s585, 8
          %s587 = scalar_lea.vmem [#allocation10], %s586
          %588 = dma.done %s584, 128
        $region68: #{tpu_custom_call.1} parent=63 // pred_fallthru
          _
      $region64: #{tpu_custom_call.1} parent=5 // pred_fallthru
        _
    $region6: #{tpu_custom_call.1} parent=1 // loop_footer
      %s23 = sadd.s32 1, %s19
    $region7: #{tpu_custom_call.1} parent=1 // loop_footer_branch
      %18 = sbr.rel target = $region3
    $region8: #{tpu_custom_call.1} parent=1 // loop_exit
      _
    %589 = vsyncpa [#allocation3], 1
    %s590 = scalar_lea.sflag [#allocation3], 1
    %591 = vsyncpa %s590, 1
    %592 = vsyncpa [#allocation6], 1
    %593 = vsyncpa [#allocation9], 1
    %594 = vsyncpa [#allocation4], 1
    %s595 = scalar_lea.sflag [#allocation4], 1
    %596 = vsyncpa %s595, 1

</llo_original>
